<compile_context>
chip_gen: v7x
topology: tpu7x:2x2x1
jax: 0.10.0
libtpu: 0.0.40
codegen_flags: <defaults>
</compile_context>

<pallas_src>
import functools

import jax
import jax.numpy as jnp
from jax.experimental import pallas as pl
from jax.experimental.pallas import tpu as pltpu


def _round_up(x: int, m: int) -> int:
    return ((x + m - 1) // m) * m


# ---------------------------------------------------------------------------
# Graph glue (plain JAX / XLA) — reference-only helpers.
# TODO(synk): the original repo's `edge_laplacian` / `degree_normalization`
# are not part of the provided module; we use the incidence-based edge
# Laplacian L = B B^T (signed incidence for orientation-equivariant, unsigned
# for orientation-invariant) with symmetric abs-row-sum degree normalization.
# TODO(synk): exact role of undirected_mask unknown from the module; ignored.
# ---------------------------------------------------------------------------
def edge_laplacian(edge_index, undirected_mask, matrix_type, num_nodes):
    src, dst = edge_index[0], edge_index[1]
    src_oh = jax.nn.one_hot(src, num_nodes, dtype=jnp.float32)  # [E, N]
    dst_oh = jax.nn.one_hot(dst, num_nodes, dtype=jnp.float32)  # [E, N]
    if matrix_type == "orientation-equivariant":
        B = dst_oh - src_oh
    else:  # "orientation-invariant"
        B = dst_oh + src_oh
    del undirected_mask
    return B @ B.T  # [E, E]


def degree_normalization(L):
    deg = jnp.abs(L).sum(axis=1)
    d_inv_sqrt = jnp.where(deg > 0.0, jax.lax.rsqrt(jnp.maximum(deg, 1e-12)), 0.0)
    return L * d_inv_sqrt[:, None] * d_inv_sqrt[None, :]


# ---------------------------------------------------------------------------
# Pallas kernel:
#   out[i] = d_inv_sqrt[i] * sum_k L[i,k] @ h_all_scaled[k]  +  (h_skip + bias)[i]
# accumulated directly in the f32 output block (resident across the k axis).
# ---------------------------------------------------------------------------
def edge_conv_kernel(l_ref, h_all_ref, h_skip_ref, dinv_ref, o_ref, *,
                     tk, h_all_resident):
    k = pl.program_id(1)

    @pl.when(k == 0)
    def _():
        o_ref[...] = jnp.zeros_like(o_ref)

    if h_all_resident:
        start = pl.multiple_of(k * tk, 128)
        h_blk = h_all_ref[pl.ds(start, tk), :]
    else:
        h_blk = h_all_ref[...]

    # compute-dtype x compute-dtype -> f32 accumulation on the MXU.
    o_ref[...] += jnp.dot(l_ref[...], h_blk, preferred_element_type=jnp.float32)

    @pl.when(k == pl.num_programs(1) - 1)
    def _():
        # Outer D^-1/2 row scaling + (skip + bias), both unnormalized.
        o_ref[...] = o_ref[...] * dinv_ref[...] + h_skip_ref[...]


# ---------------------------------------------------------------------------
# Tile selection against a per-generation VMEM budget.
# ---------------------------------------------------------------------------
def _vmem_capacity_bytes() -> int:
    try:
        cap = int(pltpu.get_tpu_info().vmem_capacity_bytes)
        if cap > 0:
            return cap
    except Exception:
        pass
    return 64 * 1024 * 1024  # conservative fallback (v7x-sized)


def _select_tiles(E, cp, itemsize, cap_bytes, *, tm_target=512):
    budget = int(cap_bytes * 0.70)  # leave headroom for compiler scratch
    # Bigger k tiles on 128 MiB-VMEM parts (v5e/v6e); smaller on v7x (64 MiB).
    tk_target0 = 8192 if cap_bytes >= 96 * (1 << 20) else 4096

    EP8, EP128 = _round_up(E, 8), _round_up(E, 128)

    def row_tiles(tmt):
        n_i = max(1, -(-EP8 // tmt))
        if n_i == 1 and EP8 >= 16:
            n_i = 2  # >=2 row blocks so the "parallel" axis can use both v7x TCs
        tm = _round_up(-(-EP8 // n_i), 8)
        return tm, n_i * tm

    def col_tiles(tkt):
        n_k = max(1, -(-EP128 // tkt))
        tk = _round_up(-(-EP128 // n_k), 128)
        return tk, n_k * tk

    def footprint(tm, tk, EP_k, resident):
        f = 2 * tm * tk * itemsize                            # L tiles (dbl-buf)
        f += 2 * (EP_k if resident else tk) * cp * itemsize   # h_all
        f += 2 * tm * cp * 4                                  # h_skip tiles
        f += 2 * tm * cp * 4                                  # output tiles
        f += 2 * tm * 128 * 4                                 # d_inv_sqrt tiles
        return f

    tm, EP_r = row_tiles(tm_target)

    tk, EP_k, resident = None, None, True
    for resident in (True, False):
        tk_target = tk_target0
        tk, EP_k = col_tiles(tk_target)
        while footprint(tm, tk, EP_k, resident) > budget and tk_target > 1024:
            tk_target //= 2
            tk, EP_k = col_tiles(tk_target)
        if footprint(tm, tk, EP_k, resident) <= budget:
            break

    vmem_limit = min(cap_bytes,
                     max(budget, int(footprint(tm, tk, EP_k, resident) * 1.25)))
    return tm, tk, EP_r, EP_k, resident, vmem_limit


# ---------------------------------------------------------------------------
# Forward pass.
# ---------------------------------------------------------------------------
@functools.partial(jax.jit,
                   static_argnames=("matrix_type", "num_nodes", "compute_dtype"))
def edge_conv_forward(edge_index, edge_attr, undirected_mask,
                      w_all, w_skip, bias, *, matrix_type, num_nodes,
                      compute_dtype=jnp.bfloat16):
    E, _ = edge_attr.shape
    Cout = w_all.shape[1]
    cdt = jnp.dtype(compute_dtype)
    cp = _round_up(Cout, 128)  # lane-dense output / h_all channel dim

    cap = _vmem_capacity_bytes()
    tm, tk, EP_r, EP_k, resident, vmem_limit = _select_tiles(
        E, cp, cdt.itemsize, cap)
    n_i, n_k = EP_r // tm, EP_k // tk

    # ---- Incidence matrix (small: E x N), padded BEFORE the B @ B^T matmul so
    # the unnormalized Laplacian is emitted directly in compute dtype and
    # already padded to the tile grid (no separate E^2 cast/pad pass).
    src, dst = edge_index[0], edge_index[1]
    src_oh = jax.nn.one_hot(src, num_nodes, dtype=jnp.float32)
    dst_oh = jax.nn.one_hot(dst, num_nodes, dtype=jnp.float32)
    if matrix_type == "orientation-equivariant":
        B = dst_oh - src_oh
    else:
        B = dst_oh + src_oh
    # TODO(synk): undirected_mask semantics unknown from the module; unused.
    del undirected_mask

    EP_max = max(EP_r, EP_k)
    B_pad = jnp.zeros((EP_max, num_nodes), cdt).at[:E].set(B.astype(cdt))
    L_p = jnp.dot(B_pad[:EP_r], B_pad[:EP_k].T)  # [EP_r, EP_k], unnormalized, cdt

    # Degree normalization folded into the kernel (D^-1/2 L D^-1/2 h =
    # D^-1/2 (L (D^-1/2 h))); only the abs-row-sum pass over L remains here.
    deg = jnp.abs(L_p).sum(axis=1, dtype=jnp.float32)                 # (EP_r,)
    d_inv_sqrt = jnp.where(deg > 0.0,
                           jax.lax.rsqrt(jnp.maximum(deg, 1e-12)), 0.0)

    # Tiny projections fused into one matmul, hoisted out of the Pallas loop;
    # inner D^-1/2 pre-scales h_all rows; bias folded into the skip term.
    h = edge_attr.astype(jnp.float32) @ jnp.concatenate([w_all, w_skip], axis=1)
    h_all = h[:, :Cout] * d_inv_sqrt[:E, None]
    h_skip_b = h[:, Cout:] + bias[None, :]

    h_all_p = jnp.zeros((EP_k, cp), cdt).at[:E, :Cout].set(h_all.astype(cdt))
    h_skip_p = jnp.zeros((EP_r, cp), jnp.float32).at[:E, :Cout].set(h_skip_b)
    dinv_p = d_inv_sqrt[:, None]                                      # (EP_r, 1)

    if resident:
        h_all_spec = pl.BlockSpec((EP_k, cp), lambda i, k: (0, 0))
        h_all_bytes = EP_k * cp * cdt.itemsize
    else:
        h_all_spec = pl.BlockSpec((tk, cp), lambda i, k: (k, 0))
        h_all_bytes = n_i * EP_k * cp * cdt.itemsize

    cost = pl.CostEstimate(
        flops=2 * EP_r * EP_k * cp + 3 * EP_r * cp,
        transcendentals=0,
        bytes_accessed=(EP_r * EP_k * cdt.itemsize   # L stream (dominant)
                        + h_all_bytes                # h_all (resident: once)
                        + EP_r * cp * 4 * 2          # h_skip + output
                        + EP_r * 4),                 # d_inv_sqrt
    )

    kernel = functools.partial(edge_conv_kernel, tk=tk, h_all_resident=resident)

    out = pl.pallas_call(
        kernel,
        out_shape=jax.ShapeDtypeStruct((EP_r, cp), jnp.float32),
        grid_spec=pltpu.PrefetchScalarGridSpec(
            num_scalar_prefetch=0,
            grid=(n_i, n_k),
            in_specs=[
                pl.BlockSpec((tm, tk), lambda i, k: (i, k)),   # L tile
                h_all_spec,                                    # h_all (resident)
                pl.BlockSpec((tm, cp), lambda i, k: (i, 0)),   # skip + bias
                pl.BlockSpec((tm, 1), lambda i, k: (i, 0)),    # d_inv_sqrt rows
            ],
            out_specs=pl.BlockSpec((tm, cp), lambda i, k: (i, 0)),
        ),
        compiler_params=pltpu.CompilerParams(
            dimension_semantics=("parallel", "arbitrary"),
            vmem_limit_bytes=vmem_limit,
        ),
        cost_estimate=cost,
    )(L_p, h_all_p, h_skip_p, dinv_p)

    return out[:E, :Cout]


# ---------------------------------------------------------------------------
# Reference (pure JAX, f32) for correctness check.
# ---------------------------------------------------------------------------
def edge_conv_reference(edge_index, edge_attr, undirected_mask,
                        w_all, w_skip, bias, *, matrix_type, num_nodes):
    L = degree_normalization(
        edge_laplacian(edge_index, undirected_mask, matrix_type, num_nodes))
    h_all = edge_attr @ w_all
    h_skip = edge_attr @ w_skip
    return L @ h_all + h_skip + bias[None, :]


if __name__ == "__main__":
    # Small, deterministic problem.
    E, N = 128, 32          # edges, nodes
    Cin, Cout = 16, 32      # in_channels, out_channels
    matrix_type = "orientation-equivariant"

    key = jax.random.PRNGKey(0)
    k_src, k_dst, k_attr, k_mask, k_wall, k_wskip = jax.random.split(key, 6)

    src = jax.random.randint(k_src, (E,), 0, N, dtype=jnp.int32)
    dst = jax.random.randint(k_dst, (E,), 0, N, dtype=jnp.int32)
    edge_index = jnp.stack([src, dst], axis=0)                    # [2, E]
    edge_attr = jax.random.normal(k_attr, (E, Cin), jnp.float32)  # [E, Cin]
    undirected_mask = jax.random.bernoulli(k_mask, 0.5, (E,))     # [E]

    # Deterministic parameter init mimicking nn.Linear.reset_parameters
    # (kaiming-uniform: U(-1/sqrt(fan_in), 1/sqrt(fan_in))); bias filled with 0.
    bound = 1.0 / jnp.sqrt(jnp.float32(Cin))
    w_all = jax.random.uniform(k_wall, (Cin, Cout), jnp.float32, -bound, bound)
    w_skip = jax.random.uniform(k_wskip, (Cin, Cout), jnp.float32, -bound, bound)
    bias = jnp.zeros((Cout,), jnp.float32)

    ref = edge_conv_reference(edge_index, edge_attr, undirected_mask,
                              w_all, w_skip, bias,
                              matrix_type=matrix_type, num_nodes=N)

    # f32 path: tight check against the reference.
    out_f32 = edge_conv_forward(edge_index, edge_attr, undirected_mask,
                                w_all, w_skip, bias,
                                matrix_type=matrix_type, num_nodes=N,
                                compute_dtype=jnp.float32)
    out_f32 = jax.block_until_ready(out_f32)
    assert out_f32.shape == (E, Cout)
    assert jnp.allclose(out_f32, ref, atol=1e-4, rtol=1e-4)

    # Default bf16 path (halves the dominant E^2 HBM stream; Laplacian entries
    # are small integers so the bf16 L stream is lossless): looser check.
    out_bf16 = edge_conv_forward(edge_index, edge_attr, undirected_mask,
                                 w_all, w_skip, bias,
                                 matrix_type=matrix_type, num_nodes=N)
    out_bf16 = jax.block_until_ready(out_bf16)
    assert out_bf16.shape == (E, Cout)
    assert jnp.allclose(out_bf16, ref, atol=5e-2, rtol=5e-2)

    print("KERNEL_OK")
</pallas_src>

<mosaic_0001>
module attributes {stable_mosaic.version = 11 : i64} {
  func.func @edge_conv_kernel(%arg0: i32, %arg1: i32, %arg2: memref<64x128xf32, #tpu.memory_space<vmem>>, %arg3: memref<128x128xf32, #tpu.memory_space<vmem>>, %arg4: memref<64x128xf32, #tpu.memory_space<vmem>>, %arg5: memref<64x1xf32, #tpu.memory_space<vmem>>, %arg6: memref<64x128xf32, #tpu.memory_space<vmem>>) attributes {dimension_semantics = [#tpu.dimension_semantics<parallel>, #tpu.dimension_semantics<arbitrary>], iteration_bounds = array<i64: 2, 1>, scalar_prefetch = 0 : i64, scratch_operands = 0 : i64, tpu.core_type = #tpu.core_type<tc>, window_params = [{transform_indices = @transform_0, window_bounds = array<i64: 64, 128>}, {pipeline_mode = #tpu.pipeline_mode<synchronous>, transform_indices = @transform_1, window_bounds = array<i64: 128, 128>}, {transform_indices = @transform_2, window_bounds = array<i64: 64, 128>}, {transform_indices = @transform_3, window_bounds = array<i64: 64, 1>}, {transform_indices = @transform_4, window_bounds = array<i64: 64, 128>}]} {
    %c0_i32 = arith.constant 0 : i32
    %0 = arith.cmpi eq, %arg1, %c0_i32 : i32
    %1 = arith.extui %0 : i1 to i32
    %c0_i32_0 = arith.constant 0 : i32
    %2 = arith.cmpi ne, %1, %c0_i32_0 : i32
    scf.if %2 {
      %cst_9 = arith.constant 0.000000e+00 : f32
      %15 = vector.broadcast %cst_9 : f32 to vector<64x128xf32>
      %c0_10 = arith.constant 0 : index
      %c0_11 = arith.constant 0 : index
      %16 = vector.load %arg6[%c0_10, %c0_11] : memref<64x128xf32, #tpu.memory_space<vmem>>, vector<64x128xf32>
      tpu.vector_store %arg6[%c0_10, %c0_11], %15 {strides = array<i32>} : memref<64x128xf32, #tpu.memory_space<vmem>>, vector<64x128xf32>,
    } else {
    }
    %c128_i32 = arith.constant 128 : i32
    %3 = arith.muli %arg1, %c128_i32 : i32
    %4 = tpu.assume_multiple %3, 128 : i32
    %5 = arith.index_cast %4 : i32 to index
    %c0 = arith.constant 0 : index
    %6 = vector.load %arg3[%5, %c0] : memref<128x128xf32, #tpu.memory_space<vmem>>, vector<128x128xf32>
    %c0_1 = arith.constant 0 : index
    %c0_2 = arith.constant 0 : index
    %7 = vector.load %arg6[%c0_1, %c0_2] : memref<64x128xf32, #tpu.memory_space<vmem>>, vector<64x128xf32>
    %c0_3 = arith.constant 0 : index
    %c0_4 = arith.constant 0 : index
    %8 = vector.load %arg2[%c0_3, %c0_4] : memref<64x128xf32, #tpu.memory_space<vmem>>, vector<64x128xf32>
    %cst = arith.constant dense<0.000000e+00> : vector<64x128xf32>
    %9 = tpu.matmul %8, %6, %cst {dimension_numbers = #tpu.dot_dimension_numbers<[1], [0], [0], [1], [0, 0, 1, 1], [], []>} : vector<64x128xf32>, vector<128x128xf32>, vector<64x128xf32> -> vector<64x128xf32>
    %10 = arith.addf %7, %9 : vector<64x128xf32>
    %c0_5 = arith.constant 0 : index
    %c0_6 = arith.constant 0 : index
    %11 = vector.load %arg6[%c0_5, %c0_6] : memref<64x128xf32, #tpu.memory_space<vmem>>, vector<64x128xf32>
    tpu.vector_store %arg6[%c0_5, %c0_6], %10 {strides = array<i32>} : memref<64x128xf32, #tpu.memory_space<vmem>>, vector<64x128xf32>,
    %c0_i32_7 = arith.constant 0 : i32
    %12 = arith.cmpi eq, %arg1, %c0_i32_7 : i32
    %13 = arith.extui %12 : i1 to i32
    %c0_i32_8 = arith.constant 0 : i32
    %14 = arith.cmpi ne, %13, %c0_i32_8 : i32
    scf.if %14 {
      %c0_9 = arith.constant 0 : index
      %c0_10 = arith.constant 0 : index
      %15 = vector.load %arg6[%c0_9, %c0_10] : memref<64x128xf32, #tpu.memory_space<vmem>>, vector<64x128xf32>
      %c0_11 = arith.constant 0 : index
      %c0_12 = arith.constant 0 : index
      %16 = vector.load %arg5[%c0_11, %c0_12] : memref<64x1xf32, #tpu.memory_space<vmem>>, vector<64x1xf32>
      %17 = vector.broadcast %16 : vector<64x1xf32> to vector<64x128xf32>
      %18 = arith.mulf %15, %17 : vector<64x128xf32>
      %c0_13 = arith.constant 0 : index
      %c0_14 = arith.constant 0 : index
      %19 = vector.load %arg4[%c0_13, %c0_14] : memref<64x128xf32, #tpu.memory_space<vmem>>, vector<64x128xf32>
      %20 = arith.addf %18, %19 : vector<64x128xf32>
      %c0_15 = arith.constant 0 : index
      %c0_16 = arith.constant 0 : index
      %21 = vector.load %arg6[%c0_15, %c0_16] : memref<64x128xf32, #tpu.memory_space<vmem>>, vector<64x128xf32>
      tpu.vector_store %arg6[%c0_15, %c0_16], %20 {strides = array<i32>} : memref<64x128xf32, #tpu.memory_space<vmem>>, vector<64x128xf32>,
    } else {
    }
    return
  }
  func.func @transform_0(%arg0: i32, %arg1: i32) -> (i32, i32) {
    %c0_i32 = arith.constant 0 : i32
    return %arg0, %arg1 : i32, i32
  }
  func.func @transform_1(%arg0: i32, %arg1: i32) -> (i32, i32) {
    %c0_i32 = arith.constant 0 : i32
    %c0_i32_0 = arith.constant 0 : i32
    %c0_i32_1 = arith.constant 0 : i32
    return %c0_i32, %c0_i32_0 : i32, i32
  }
  func.func @transform_2(%arg0: i32, %arg1: i32) -> (i32, i32) {
    %c0_i32 = arith.constant 0 : i32
    %c0_i32_0 = arith.constant 0 : i32
    return %arg0, %c0_i32 : i32, i32
  }
  func.func @transform_3(%arg0: i32, %arg1: i32) -> (i32, i32) {
    %c0_i32 = arith.constant 0 : i32
    %c0_i32_0 = arith.constant 0 : i32
    return %arg0, %c0_i32 : i32, i32
  }
  func.func @transform_4(%arg0: i32, %arg1: i32) -> (i32, i32) {
    %c0_i32 = arith.constant 0 : i32
    %c0_i32_0 = arith.constant 0 : i32
    return %arg0, %c0_i32 : i32, i32
  }
}

</mosaic_0001>

<llo_original>
// kernel: edge_conv_forward.1
$region0: #{edge_conv_forward.1}
  #allocation0 [shape = 'u32[]', space=smem, size = 0x4, offset = 0x4, fixed_abs, tag = 'smem constant byte address 0x4 - core index']
  #allocation1 [shape = 'u32[144,128]{1,0:T(1,128)}', space=vmem, size = 0x12000, scoped, tag = 'internal scratch']
  %s0 = inlined_call_operand.vmem [shape: f32[128,128], index: 0, kind: input, shape index: {}]
  %s1 = inlined_call_operand.vmem [shape: f32[128,128], index: 1, kind: input, shape index: {}]
  %s2 = inlined_call_operand.vmem [shape: f32[128,128], index: 2, kind: input, shape index: {}]
  %s3 = inlined_call_operand.vmem [shape: f32[128,1], index: 3, kind: input, shape index: {}]
  %s4 = inlined_call_operand.vmem [shape: f32[128,128], index: 4, kind: output, shape index: {}]
  %s5 = sld [smem:[#allocation0]]
  $region57: #{edge_conv_forward.1} parent=0
    _
  %s7 = ssub.s32 1, %s5
  %s8 = scalar_select 0, %s7, %s5
  loop: start=0, step=1, limit=4
  $region2: #{edge_conv_forward.1} parent=0 // loop_pre_header
    _
  $region3: #{edge_conv_forward.1} parent=0 // loop_header
    %s10 = sphi 0, %s14
    %p11 = scmp.ge.s32.totalorder %s10, 4
    %s17 = sphi 0, %s29
    %s18 = sphi 0, %s25
    %s19 = sphi 0, %s17
    %s20 = sphi 0, %s18
    %s21 = sphi 0, %s19
    %s22 = sphi 0, %s20
    %s34 = sphi 0, %s36
    %s37 = sphi 0, %s34
    %s38 = sphi 0, %s37
    %s54 = sphi 0, %s38
    %s58 = sphi 0, %s58
    %s60 = sphi 0, %s58
    %s61 = sphi 0, %s60
    %s75 = sphi 0, %s61
    %s81 = sphi 0, %s83
    %s84 = sphi 0, %s81
    %s85 = sphi 0, %s84
    %s101 = sphi 0, %s85
    %s107 = sphi 0, %s109
    %s110 = sphi 0, %s107
    %s111 = sphi 0, %s110
    %s127 = sphi 0, %s111
    %s133 = sphi 0, %s135
    %s136 = sphi 0, %s133
    %s137 = sphi 0, %s136
    %s153 = sphi 0, %s137
  $region4: #{edge_conv_forward.1} parent=0 // loop_header_branch
    %13 = sbr.rel (%p11) target = $region8
  $region5: #{edge_conv_forward.1} parent=0 // loop_body
    %s15 = ssub.s32 %s10, 1
    %s16 = ssub.s32 %s10, 2
    %s23 = sadd.s32 1, %s18
    %p24 = scmp.ge.s32.totalorder %s23, 1
    %s25 = scalar_select %p24, 0, %s23
    %s26 = sadd.s32 1, %s17
    %s27 = scalar_select %p24, %s26, %s17
    %p28 = scmp.ge.s32.totalorder %s27, 2
    %s29 = scalar_select %p28, 0, %s27
    %s30 = ssub.s32 %s17, %s29
    %s31 = ssub.s32 %s18, %s25
    %s32 = sor.u32 %s30, %s31
    %p33 = scmp.eq.s32.totalorder %s32, 0
    %s35 = sadd.s32 %s34, 1
    %s36 = scalar_select %p33, %s34, %s35
    %p39 = pneg %p33
    %p40 = scmp.eq.s32.totalorder %s10, 1
    %p41 = por %p39, %p40
    %p42 = scmp.ne.s32.totalorder %s34, %s37
    %p43 = scmp.eq.s32.totalorder %s10, 0
    %p44 = por %p42, %p43
    %p45 = scmp.ne.s32.totalorder %s34, %s37
    %p46 = scmp.eq.s32.totalorder %s15, 1
    %p47 = por %p45, %p46
    %p48 = scmp.ne.s32.totalorder %s37, %s38
    %p49 = scmp.eq.s32.totalorder %s15, 0
    %p50 = por %p48, %p49
    %p51 = scmp.ne.s32.totalorder %s37, %s38
    %p52 = scmp.eq.s32.totalorder %s16, 1
    %p53 = por %p51, %p52
    %p55 = scmp.ne.s32.totalorder %s38, %s54
    %p56 = scmp.eq.s32.totalorder %s16, 0
    %p57 = por %p55, %p56
    %s59 = sadd.s32 %s58, 1
    %p62 = scmp.eq.s32.totalorder %s10, 1
    %p63 = scmp.ne.s32.totalorder %s58, %s60
    %p64 = scmp.eq.s32.totalorder %s10, 0
    %p65 = por %p63, %p64
    %p66 = scmp.ne.s32.totalorder %s58, %s60
    %p67 = scmp.eq.s32.totalorder %s15, 1
    %p68 = por %p66, %p67
    %p69 = scmp.ne.s32.totalorder %s60, %s61
    %p70 = scmp.eq.s32.totalorder %s15, 0
    %p71 = por %p69, %p70
    %p72 = scmp.ne.s32.totalorder %s60, %s61
    %p73 = scmp.eq.s32.totalorder %s16, 1
    %p74 = por %p72, %p73
    %p76 = scmp.ne.s32.totalorder %s61, %s75
    %p77 = scmp.eq.s32.totalorder %s16, 0
    %p78 = por %p76, %p77
    %s79 = ssub.s32 %s17, %s29
    %p80 = scmp.eq.s32.totalorder %s79, 0
    %s82 = sadd.s32 %s81, 1
    %s83 = scalar_select %p80, %s81, %s82
    %p86 = pneg %p80
    %p87 = scmp.eq.s32.totalorder %s10, 1
    %p88 = por %p86, %p87
    %p89 = scmp.ne.s32.totalorder %s81, %s84
    %p90 = scmp.eq.s32.totalorder %s10, 0
    %p91 = por %p89, %p90
    %p92 = scmp.ne.s32.totalorder %s81, %s84
    %p93 = scmp.eq.s32.totalorder %s15, 1
    %p94 = por %p92, %p93
    %p95 = scmp.ne.s32.totalorder %s84, %s85
    %p96 = scmp.eq.s32.totalorder %s15, 0
    %p97 = por %p95, %p96
    %p98 = scmp.ne.s32.totalorder %s84, %s85
    %p99 = scmp.eq.s32.totalorder %s16, 1
    %p100 = por %p98, %p99
    %p102 = scmp.ne.s32.totalorder %s85, %s101
    %p103 = scmp.eq.s32.totalorder %s16, 0
    %p104 = por %p102, %p103
    %s105 = ssub.s32 %s17, %s29
    %p106 = scmp.eq.s32.totalorder %s105, 0
    %s108 = sadd.s32 %s107, 1
    %s109 = scalar_select %p106, %s107, %s108
    %p112 = pneg %p106
    %p113 = scmp.eq.s32.totalorder %s10, 1
    %p114 = por %p112, %p113
    %p115 = scmp.ne.s32.totalorder %s107, %s110
    %p116 = scmp.eq.s32.totalorder %s10, 0
    %p117 = por %p115, %p116
    %p118 = scmp.ne.s32.totalorder %s107, %s110
    %p119 = scmp.eq.s32.totalorder %s15, 1
    %p120 = por %p118, %p119
    %p121 = scmp.ne.s32.totalorder %s110, %s111
    %p122 = scmp.eq.s32.totalorder %s15, 0
    %p123 = por %p121, %p122
    %p124 = scmp.ne.s32.totalorder %s110, %s111
    %p125 = scmp.eq.s32.totalorder %s16, 1
    %p126 = por %p124, %p125
    %p128 = scmp.ne.s32.totalorder %s111, %s127
    %p129 = scmp.eq.s32.totalorder %s16, 0
    %p130 = por %p128, %p129
    %s131 = ssub.s32 %s17, %s29
    %p132 = scmp.eq.s32.totalorder %s131, 0
    %s134 = sadd.s32 %s133, 1
    %s135 = scalar_select %p132, %s133, %s134
    %p138 = pneg %p132
    %p139 = scmp.eq.s32.totalorder %s10, 1
    %p140 = por %p138, %p139
    %p141 = scmp.ne.s32.totalorder %s133, %s136
    %p142 = scmp.eq.s32.totalorder %s10, 0
    %p143 = por %p141, %p142
    %p144 = scmp.ne.s32.totalorder %s133, %s136
    %p145 = scmp.eq.s32.totalorder %s15, 1
    %p146 = por %p144, %p145
    %p147 = scmp.ne.s32.totalorder %s136, %s137
    %p148 = scmp.eq.s32.totalorder %s15, 0
    %p149 = por %p147, %p148
    %p150 = scmp.ne.s32.totalorder %s136, %s137
    %p151 = scmp.eq.s32.totalorder %s16, 1
    %p152 = por %p150, %p151
    %p154 = scmp.ne.s32.totalorder %s137, %s153
    %p155 = scmp.eq.s32.totalorder %s16, 0
    %p156 = por %p154, %p155
    %p157 = scmp.le.s32.totalorder 1, %s10
    %p158 = scmp.lt.s32.totalorder %s10, 3
    %p159 = pnand %p157, %p158
    %p160 = pneg %p159
    // Predicated region
    $region9: #{edge_conv_forward.1} parent=5 // pred_check
      _
    $region10: #{edge_conv_forward.1} parent=5 // pred_check_branch
      %162 = sbr.rel (%p159) target = $region12
    $region11: #{edge_conv_forward.1} parent=5 // pred_region
      %s163 = ssub.s32 %s10, 1
      // Predicated region
      $region13: #{edge_conv_forward.1} parent=11 // pred_check
        %p164 = pneg %p71
      $region14: #{edge_conv_forward.1} parent=11 // pred_check_branch
        %166 = sbr.rel (%p164) target = $region16
      $region15: #{edge_conv_forward.1} parent=11 // pred_region
        _
      $region16: #{edge_conv_forward.1} parent=11 // pred_fallthru
        _
    $region12: #{edge_conv_forward.1} parent=5 // pred_fallthru
      _
    %p167 = scmp.lt.s32.totalorder %s10, 2
    // Predicated region
    $region17: #{edge_conv_forward.1} parent=5 // pred_check
      %p168 = pneg %p167
    $region18: #{edge_conv_forward.1} parent=5 // pred_check_branch
      %170 = sbr.rel (%p168) target = $region20
    $region19: #{edge_conv_forward.1} parent=5 // pred_region
      // Predicated region
      $region21: #{edge_conv_forward.1} parent=19 // pred_check
        %p171 = pneg %p44
      $region22: #{edge_conv_forward.1} parent=19 // pred_check_branch
        %173 = sbr.rel (%p171) target = $region24
      $region23: #{edge_conv_forward.1} parent=19 // pred_region
        %s174 = smul.u32 8, %s17
        %p175 = scmp.lt.s32.totalorder %s174, 15
        %s176 = scalar_select %p175, %s174, 15
        %p177 = scmp.lt.s32.totalorder %s18, 0
        %s178 = scalar_select %p177, %s18, 0
        %s179 = sadd.s32 %s178, %s176
        %s180 = smul.addr %s179, 8
        %s181 = scalar_lea.vmem %s0, %s180
        %s182 = smul.u32 8, %s17
      $region24: #{edge_conv_forward.1} parent=19 // pred_fallthru
        _
      // Predicated region
      $region25: #{edge_conv_forward.1} parent=19 // pred_check
        %p183 = pneg %p91
      $region26: #{edge_conv_forward.1} parent=19 // pred_check_branch
        %185 = sbr.rel (%p183) target = $region28
      $region27: #{edge_conv_forward.1} parent=19 // pred_region
        %s186 = smul.u32 8, %s17
        %p187 = scmp.lt.s32.totalorder %s186, 15
        %s188 = scalar_select %p187, %s186, 15
        %s189 = smul.addr %s188, 8
        %s190 = scalar_lea.vmem %s2, %s189
        %s191 = smul.u32 8, %s17
      $region28: #{edge_conv_forward.1} parent=19 // pred_fallthru
        _
      // Predicated region
      $region29: #{edge_conv_forward.1} parent=19 // pred_check
        %p192 = pneg %p117
      $region30: #{edge_conv_forward.1} parent=19 // pred_check_branch
        %194 = sbr.rel (%p192) target = $region32
      $region31: #{edge_conv_forward.1} parent=19 // pred_region
        %s195 = smul.u32 8, %s17
        %p196 = scmp.lt.s32.totalorder %s195, 15
        %s197 = scalar_select %p196, %s195, 15
        %s198 = smul.addr %s197, 8
        %s199 = scalar_lea.vmem %s3, %s198
        %s200 = smul.u32 8, %s17
      $region32: #{edge_conv_forward.1} parent=19 // pred_fallthru
        _
    $region20: #{edge_conv_forward.1} parent=5 // pred_fallthru
      _
    %p201 = scmp.le.s32.totalorder 1, %s10
    %p202 = scmp.lt.s32.totalorder %s10, 3
    %p203 = pnand %p201, %p202
    %p204 = pneg %p203
    // Predicated region
    $region33: #{edge_conv_forward.1} parent=5 // pred_check
      _
    $region34: #{edge_conv_forward.1} parent=5 // pred_check_branch
      %206 = sbr.rel (%p203) target = $region36
    $region35: #{edge_conv_forward.1} parent=5 // pred_region
      %s207 = ssub.s32 %s10, 1
      %s208 = smul.u32 8, %s19
      %p209 = scmp.lt.s32.totalorder %s208, 15
      %s210 = scalar_select %p209, %s208, 15
      %p211 = scmp.lt.s32.totalorder %s20, 0
      %s212 = scalar_select %p211, %s20, 0
      %s213 = sadd.s32 %s212, %s210
      %s214 = smul.addr %s213, 8
      %s215 = scalar_lea.vmem %s0, %s214
      %p216 = pneg %p50
      %p217 = pneg %p47
      %p218 = pneg %p71
      %p219 = pneg %p68
      %s220 = smul.u32 8, %s19
      %p221 = scmp.lt.s32.totalorder %s220, 15
      %s222 = scalar_select %p221, %s220, 15
      %s223 = smul.addr %s222, 8
      %s224 = scalar_lea.vmem %s2, %s223
      %p225 = pneg %p97
      %p226 = pneg %p94
      %s227 = smul.u32 8, %s19
      %p228 = scmp.lt.s32.totalorder %s227, 15
      %s229 = scalar_select %p228, %s227, 15
      %s230 = smul.addr %s229, 8
      %s231 = scalar_lea.vmem %s3, %s230
      %p232 = pneg %p123
      %p233 = pneg %p120
      %p234 = pneg %p149
      %p235 = pneg %p146
      %s236 = smul.u32 8, %s19
      %p237 = scmp.lt.s32.totalorder %s236, 15
      %s238 = scalar_select %p237, %s236, 15
      %s239 = smul.addr %s238, 8
      %s240 = scalar_lea.vmem %s4, %s239
      %s241 = smul.u32 8, %s19
      %p242 = scmp.lt.s32.totalorder %s241, 15
      %s243 = scalar_select %p242, %s241, 15
      %p244 = scmp.lt.s32.totalorder %s20, 0
      %s245 = scalar_select %p244, %s20, 0
      %s246 = sadd.s32 %s245, %s243
      %s247 = smul.addr %s246, 8
      %s248 = scalar_lea.vmem %s0, %s247
      %s249 = smul.u32 8, %s19
      %s250 = smul.u32 8, %s19
      %p251 = scmp.lt.s32.totalorder %s250, 15
      %s252 = scalar_select %p251, %s250, 15
      %s253 = smul.addr %s252, 8
      %s254 = scalar_lea.vmem %s2, %s253
      %s255 = smul.u32 8, %s19
      %s256 = smul.u32 8, %s19
      %p257 = scmp.lt.s32.totalorder %s256, 15
      %s258 = scalar_select %p257, %s256, 15
      %s259 = smul.addr %s258, 8
      %s260 = scalar_lea.vmem %s3, %s259
      %s261 = smul.u32 8, %s19
      %s262 = smul.u32 8, %s19
      %p263 = scmp.lt.s32.totalorder %s262, 15
      %s264 = scalar_select %p263, %s262, 15
      %s265 = smul.addr %s264, 8
      %s266 = scalar_lea.vmem %s4, %s265
      %s267 = smul.u32 8, %s19
      %p268 = scmp.eq.s32.totalorder %s20, 0
      // Predicated region
      $region37: #{edge_conv_forward.1} parent=35 // pred_check
        %p269 = pneg %p268
      $region38: #{edge_conv_forward.1} parent=35 // pred_check_branch
        %271 = sbr.rel (%p269) target = $region40
      $region39: #{edge_conv_forward.1} parent=35 // pred_region
        %272 = vst [vmem:[%s266] sm:$0xff] 0.0
        %273 = vst [vmem:[%s266 + $0x8] sm:$0xff] 0.0
        %274 = vst [vmem:[%s266 + $0x10] sm:$0xff] 0.0
        %275 = vst [vmem:[%s266 + $0x18] sm:$0xff] 0.0
        %276 = vst [vmem:[%s266 + $0x20] sm:$0xff] 0.0
        %277 = vst [vmem:[%s266 + $0x28] sm:$0xff] 0.0
        %278 = vst [vmem:[%s266 + $0x30] sm:$0xff] 0.0
        %279 = vst [vmem:[%s266 + $0x38] sm:$0xff] 0.0
      $region40: #{edge_conv_forward.1} parent=35 // pred_fallthru
        _
      %s280 = smul.u32 %s20, 128
      %s281 = scalar_lea.vmem %s1, %s280
      %v282 = vld [vmem:[%s281] sm:$0xff]
      %v283 = vld [vmem:[%s281 + $0x8] sm:$0xff]
      %v284 = vld [vmem:[%s281 + $0x10] sm:$0xff]
      %v285 = vld [vmem:[%s281 + $0x18] sm:$0xff]
      %v286 = vld [vmem:[%s281 + $0x20] sm:$0xff]
      %v287 = vld [vmem:[%s281 + $0x28] sm:$0xff]
      %v288 = vld [vmem:[%s281 + $0x30] sm:$0xff]
      %v289 = vld [vmem:[%s281 + $0x38] sm:$0xff]
      %v290 = vld [vmem:[%s281 + $0x40] sm:$0xff]
      %v291 = vld [vmem:[%s281 + $0x48] sm:$0xff]
      %v292 = vld [vmem:[%s281 + $0x50] sm:$0xff]
      %v293 = vld [vmem:[%s281 + $0x58] sm:$0xff]
      %v294 = vld [vmem:[%s281 + $0x60] sm:$0xff]
      %v295 = vld [vmem:[%s281 + $0x68] sm:$0xff]
      %v296 = vld [vmem:[%s281 + $0x70] sm:$0xff]
      %v297 = vld [vmem:[%s281 + $0x78] sm:$0xff]
      %v298 = vld [vmem:[%s266] sm:$0xff]
      %v299 = vld [vmem:[%s266 + $0x8] sm:$0xff]
      %v300 = vld [vmem:[%s266 + $0x10] sm:$0xff]
      %v301 = vld [vmem:[%s266 + $0x18] sm:$0xff]
      %v302 = vld [vmem:[%s266 + $0x20] sm:$0xff]
      %v303 = vld [vmem:[%s266 + $0x28] sm:$0xff]
      %v304 = vld [vmem:[%s266 + $0x30] sm:$0xff]
      %v305 = vld [vmem:[%s266 + $0x38] sm:$0xff]
      %v306 = vld [vmem:[%s248] sm:$0xff]
      %v307 = vld [vmem:[%s248 + $0x8] sm:$0xff]
      %v308 = vld [vmem:[%s248 + $0x10] sm:$0xff]
      %v309 = vld [vmem:[%s248 + $0x18] sm:$0xff]
      %v310 = vld [vmem:[%s248 + $0x20] sm:$0xff]
      %v311 = vld [vmem:[%s248 + $0x28] sm:$0xff]
      %v312 = vld [vmem:[%s248 + $0x30] sm:$0xff]
      %v313 = vld [vmem:[%s248 + $0x38] sm:$0xff]
      %314 = vmatprep.subr.mxu0 0.0
      %315 = vmatpush1.msra.mxu0 %v282
      %316 = vmatprep.subr.mxu0 0.0
      %317 = vmatpush1.msra.mxu0 %v283
      %318 = vmatprep.subr.mxu0 0.0
      %319 = vmatpush1.msra.mxu0 %v284
      %320 = vmatprep.subr.mxu0 0.0
      %321 = vmatpush1.msra.mxu0 %v285
      %322 = vmatprep.subr.mxu0 0.0
      %323 = vmatpush1.msra.mxu0 %v286
      %324 = vmatprep.subr.mxu0 0.0
      %325 = vmatpush1.msra.mxu0 %v287
      %326 = vmatprep.subr.mxu0 0.0
      %327 = vmatpush1.msra.mxu0 %v288
      %328 = vmatprep.subr.mxu0 0.0
      %329 = vmatpush1.msra.mxu0 %v289
      %330 = vmatprep.subr.mxu0 0.0
      %331 = vmatpush1.msra.mxu0 %v290
      %332 = vmatprep.subr.mxu0 0.0
      %333 = vmatpush1.msra.mxu0 %v291
      %334 = vmatprep.subr.mxu0 0.0
      %335 = vmatpush1.msra.mxu0 %v292
      %336 = vmatprep.subr.mxu0 0.0
      %337 = vmatpush1.msra.mxu0 %v293
      %338 = vmatprep.subr.mxu0 0.0
      %339 = vmatpush1.msra.mxu0 %v294
      %340 = vmatprep.subr.mxu0 0.0
      %341 = vmatpush1.msra.mxu0 %v295
      %342 = vmatprep.subr.mxu0 0.0
      %343 = vmatpush1.msra.mxu0 %v296
      %344 = vmatprep.subr.mxu0 0.0
      %345 = vmatpush1.msra.mxu0 %v297
      %346 = vmatprep.subr.mxu0 0.0
      %347 = vmatpush1.msra.mxu0 0.0
      %348 = vmatprep.subr.mxu0 0.0
      %349 = vmatpush1.msra.mxu0 0.0
      %350 = vmatprep.subr.mxu0 0.0
      %351 = vmatpush1.msra.mxu0 0.0
      %352 = vmatprep.subr.mxu0 0.0
      %353 = vmatpush1.msra.mxu0 0.0
      %354 = vmatprep.subr.mxu0 0.0
      %355 = vmatpush1.msra.mxu0 0.0
      %356 = vmatprep.subr.mxu0 0.0
      %357 = vmatpush1.msra.mxu0 0.0
      %358 = vmatprep.subr.mxu0 0.0
      %359 = vmatpush1.msra.mxu0 0.0
      %360 = vmatprep.subr.mxu0 0.0
      %361 = vmatpush1.msra.mxu0 0.0
      %362 = vmatprep.subr.mxu0 0.0
      %363 = vmatpush1.msra.mxu0 0.0
      %364 = vmatprep.subr.mxu0 0.0
      %365 = vmatpush1.msra.mxu0 0.0
      %366 = vmatprep.subr.mxu0 0.0
      %367 = vmatpush1.msra.mxu0 0.0
      %368 = vmatprep.subr.mxu0 0.0
      %369 = vmatpush1.msra.mxu0 0.0
      %370 = vmatprep.subr.mxu0 0.0
      %371 = vmatpush1.msra.mxu0 0.0
      %372 = vmatprep.subr.mxu0 0.0
      %373 = vmatpush1.msra.mxu0 0.0
      %374 = vmatprep.subr.mxu0 0.0
      %375 = vmatpush1.msra.mxu0 0.0
      %376 = vmatprep.subr.mxu0 0.0
      %377 = vmatpush1.msra.mxu0 0.0
      %378 = vmatprep.mubr.f32.mxu0 0.0
      %379 = vmatmul.mubr.f32.gmra.mrb[0].mxu0 %v306
      %v380 = vpop.f32.mrb[0].mxu0
      %v381 = vadd.f32 0.0, %v380
      %v382 = vpop.f32.mrb[0].mxu0
      %383 = vmatprep.mubr.f32.mxu0 0.0
      %384 = vmatmul.mubr.f32.gmra.mrb[0].mxu0 %v307
      %v385 = vpop.f32.mrb[0].mxu0
      %v386 = vadd.f32 0.0, %v385
      %v387 = vpop.f32.mrb[0].mxu0
      %388 = vmatprep.mubr.f32.mxu0 0.0
      %389 = vmatmul.mubr.f32.gmra.mrb[0].mxu0 %v308
      %v390 = vpop.f32.mrb[0].mxu0
      %v391 = vadd.f32 0.0, %v390
      %v392 = vpop.f32.mrb[0].mxu0
      %393 = vmatprep.mubr.f32.mxu0 0.0
      %394 = vmatmul.mubr.f32.gmra.mrb[0].mxu0 %v309
      %v395 = vpop.f32.mrb[0].mxu0
      %v396 = vadd.f32 0.0, %v395
      %v397 = vpop.f32.mrb[0].mxu0
      %398 = vmatprep.mubr.f32.mxu0 0.0
      %399 = vmatmul.mubr.f32.gmra.mrb[0].mxu0 %v310
      %v400 = vpop.f32.mrb[0].mxu0
      %v401 = vadd.f32 0.0, %v400
      %v402 = vpop.f32.mrb[0].mxu0
      %403 = vmatprep.mubr.f32.mxu0 0.0
      %404 = vmatmul.mubr.f32.gmra.mrb[0].mxu0 %v311
      %v405 = vpop.f32.mrb[0].mxu0
      %v406 = vadd.f32 0.0, %v405
      %v407 = vpop.f32.mrb[0].mxu0
      %408 = vmatprep.mubr.f32.mxu0 0.0
      %409 = vmatmul.mubr.f32.gmra.mrb[0].mxu0 %v312
      %v410 = vpop.f32.mrb[0].mxu0
      %v411 = vadd.f32 0.0, %v410
      %v412 = vpop.f32.mrb[0].mxu0
      %413 = vmatprep.mubr.f32.mxu0 0.0
      %414 = vmatmul.mubr.f32.gmra.mrb[0].mxu0 %v313
      %v415 = vpop.f32.mrb[0].mxu0
      %v416 = vadd.f32 0.0, %v415
      %v417 = vpop.f32.mrb[0].mxu0
      %418 = vdwg.mxu0
      %v419 = vadd.f32 %v298, %v381
      %v420 = vadd.f32 %v299, %v386
      %v421 = vadd.f32 %v300, %v391
      %v422 = vadd.f32 %v301, %v396
      %v423 = vadd.f32 %v302, %v401
      %v424 = vadd.f32 %v303, %v406
      %v425 = vadd.f32 %v304, %v411
      %v426 = vadd.f32 %v305, %v416
      %427 = vst [vmem:[%s266] sm:$0xff] %v419
      %428 = vst [vmem:[%s266 + $0x8] sm:$0xff] %v420
      %429 = vst [vmem:[%s266 + $0x10] sm:$0xff] %v421
      %430 = vst [vmem:[%s266 + $0x18] sm:$0xff] %v422
      %431 = vst [vmem:[%s266 + $0x20] sm:$0xff] %v423
      %432 = vst [vmem:[%s266 + $0x28] sm:$0xff] %v424
      %433 = vst [vmem:[%s266 + $0x30] sm:$0xff] %v425
      %434 = vst [vmem:[%s266 + $0x38] sm:$0xff] %v426
      // Predicated region
      $region41: #{edge_conv_forward.1} parent=35 // pred_check
        %p435 = pneg %p268
      $region42: #{edge_conv_forward.1} parent=35 // pred_check_branch
        %437 = sbr.rel (%p435) target = $region44
      $region43: #{edge_conv_forward.1} parent=35 // pred_region
        %v438 = vld [vmem:[%s266] sm:$0xff]
        %v439 = vld [vmem:[%s266 + $0x8] sm:$0xff]
        %v440 = vld [vmem:[%s266 + $0x10] sm:$0xff]
        %v441 = vld [vmem:[%s266 + $0x18] sm:$0xff]
        %v442 = vld [vmem:[%s266 + $0x20] sm:$0xff]
        %v443 = vld [vmem:[%s266 + $0x28] sm:$0xff]
        %v444 = vld [vmem:[%s266 + $0x30] sm:$0xff]
        %v445 = vld [vmem:[%s266 + $0x38] sm:$0xff]
        %v446 = vld [vmem:[%s260] sm:$0xff]
        %v447 = vld [vmem:[%s260 + $0x8] sm:$0xff]
        %v448 = vld [vmem:[%s260 + $0x10] sm:$0xff]
        %v449 = vld [vmem:[%s260 + $0x18] sm:$0xff]
        %v450 = vld [vmem:[%s260 + $0x20] sm:$0xff]
        %v451 = vld [vmem:[%s260 + $0x28] sm:$0xff]
        %v452 = vld [vmem:[%s260 + $0x30] sm:$0xff]
        %v453 = vld [vmem:[%s260 + $0x38] sm:$0xff]
        %455 = vset.pattern.permute.xlu0 0
        %456 = vperm.xlu0 %455, %v446
        %v457 = vpop.permute.xlu0 %456
        %460 = vset.pattern.permute.xlu0 0
        %461 = vperm.xlu0 %460, %v447
        %v462 = vpop.permute.xlu0 %461
        %465 = vset.pattern.permute.xlu0 0
        %466 = vperm.xlu0 %465, %v448
        %v467 = vpop.permute.xlu0 %466
        %470 = vset.pattern.permute.xlu0 0
        %471 = vperm.xlu0 %470, %v449
        %v472 = vpop.permute.xlu0 %471
        %475 = vset.pattern.permute.xlu0 0
        %476 = vperm.xlu0 %475, %v450
        %v477 = vpop.permute.xlu0 %476
        %480 = vset.pattern.permute.xlu0 0
        %481 = vperm.xlu0 %480, %v451
        %v482 = vpop.permute.xlu0 %481
        %485 = vset.pattern.permute.xlu0 0
        %486 = vperm.xlu0 %485, %v452
        %v487 = vpop.permute.xlu0 %486
        %490 = vset.pattern.permute.xlu0 0
        %491 = vperm.xlu0 %490, %v453
        %v492 = vpop.permute.xlu0 %491
        %v494 = vmul.f32 %v438, %v457
        %v495 = vmul.f32 %v439, %v462
        %v496 = vmul.f32 %v440, %v467
        %v497 = vmul.f32 %v441, %v472
        %v498 = vmul.f32 %v442, %v477
        %v499 = vmul.f32 %v443, %v482
        %v500 = vmul.f32 %v444, %v487
        %v501 = vmul.f32 %v445, %v492
        %v502 = vld [vmem:[%s254] sm:$0xff]
        %v503 = vld [vmem:[%s254 + $0x8] sm:$0xff]
        %v504 = vld [vmem:[%s254 + $0x10] sm:$0xff]
        %v505 = vld [vmem:[%s254 + $0x18] sm:$0xff]
        %v506 = vld [vmem:[%s254 + $0x20] sm:$0xff]
        %v507 = vld [vmem:[%s254 + $0x28] sm:$0xff]
        %v508 = vld [vmem:[%s254 + $0x30] sm:$0xff]
        %v509 = vld [vmem:[%s254 + $0x38] sm:$0xff]
        %v510 = vadd.f32 %v494, %v502
        %v511 = vadd.f32 %v495, %v503
        %v512 = vadd.f32 %v496, %v504
        %v513 = vadd.f32 %v497, %v505
        %v514 = vadd.f32 %v498, %v506
        %v515 = vadd.f32 %v499, %v507
        %v516 = vadd.f32 %v500, %v508
        %v517 = vadd.f32 %v501, %v509
        %518 = vst [vmem:[%s266] sm:$0xff] %v510
        %519 = vst [vmem:[%s266 + $0x8] sm:$0xff] %v511
        %520 = vst [vmem:[%s266 + $0x10] sm:$0xff] %v512
        %521 = vst [vmem:[%s266 + $0x18] sm:$0xff] %v513
        %522 = vst [vmem:[%s266 + $0x20] sm:$0xff] %v514
        %523 = vst [vmem:[%s266 + $0x28] sm:$0xff] %v515
        %524 = vst [vmem:[%s266 + $0x30] sm:$0xff] %v516
        %525 = vst [vmem:[%s266 + $0x38] sm:$0xff] %v517
      $region44: #{edge_conv_forward.1} parent=35 // pred_fallthru
        _
      %s526 = smul.u32 8, %s19
      %p527 = scmp.lt.s32.totalorder %s526, 15
      %s528 = scalar_select %p527, %s526, 15
      %s529 = smul.addr %s528, 8
      %s530 = scalar_lea.vmem %s4, %s529
      // Predicated region
      $region45: #{edge_conv_forward.1} parent=35 // pred_check
        %p531 = pneg %p146
      $region46: #{edge_conv_forward.1} parent=35 // pred_check_branch
        %533 = sbr.rel (%p531) target = $region48
      $region47: #{edge_conv_forward.1} parent=35 // pred_region
        %s534 = smul.u32 8, %s19
      $region48: #{edge_conv_forward.1} parent=35 // pred_fallthru
        _
    $region36: #{edge_conv_forward.1} parent=5 // pred_fallthru
      _
    %p535 = scmp.le.s32.totalorder 2, %s10
    // Predicated region
    $region49: #{edge_conv_forward.1} parent=5 // pred_check
      %p536 = pneg %p535
    $region50: #{edge_conv_forward.1} parent=5 // pred_check_branch
      %538 = sbr.rel (%p536) target = $region52
    $region51: #{edge_conv_forward.1} parent=5 // pred_region
      %s539 = ssub.s32 %s10, 2
      // Predicated region
      $region53: #{edge_conv_forward.1} parent=51 // pred_check
        %p540 = pneg %p152
      $region54: #{edge_conv_forward.1} parent=51 // pred_check_branch
        %542 = sbr.rel (%p540) target = $region56
      $region55: #{edge_conv_forward.1} parent=51 // pred_region
        %s543 = smul.u32 8, %s21
        %p544 = scmp.lt.s32.totalorder %s543, 15
        %s545 = scalar_select %p544, %s543, 15
        %s546 = smul.addr %s545, 8
        %s547 = scalar_lea.vmem %s4, %s546
      $region56: #{edge_conv_forward.1} parent=51 // pred_fallthru
        _
    $region52: #{edge_conv_forward.1} parent=5 // pred_fallthru
      _
  $region6: #{edge_conv_forward.1} parent=0 // loop_footer
    %s14 = sadd.s32 1, %s10
  $region7: #{edge_conv_forward.1} parent=0 // loop_footer_branch
    %9 = sbr.rel target = $region3
  $region8: #{edge_conv_forward.1} parent=0 // loop_exit
    _

</llo_original>
